<compile_context>
chip_gen: v7x
topology: tpu7x:2x2x1
jax: 0.10.0
libtpu: 0.0.40
codegen_flags: <defaults>
</compile_context>

<pallas_src>
import functools
import math

import jax
import jax.numpy as jnp
from jax import lax
from jax.experimental import pallas as pl
from jax.experimental.pallas import tpu as pltpu


# bf16 inputs to the MXU (f32 accumulation everywhere).  Norm statistics,
# softmax, masks and the post-softmax bias stay in f32.
_MXU_DTYPE = jnp.bfloat16

# Tile targets (re-derive / shrink for v7x 64 MiB VMEM; raise vmem_limit_bytes
# via pltpu.CompilerParams if larger tiles are wanted).
_TM, _TN, _TK = 256, 512, 512


def _tile(dim, target):
    """Largest of (target, dim) that evenly divides dim (falls back to dim)."""
    t = min(dim, target)
    return t if dim % t == 0 else dim


# --------------------- fused (RMSNorm?) + matmul + bias ----------------------

def _fused_matmul_kernel(*refs, has_gamma, has_res, act_out, eps, k_total):
    refs = list(refs)
    x_ref = refs.pop(0)
    w_ref = refs.pop(0)
    b_ref = refs.pop(0)
    g_ref = refs.pop(0) if has_gamma else None
    r_ref = refs.pop(0) if has_res else None
    o_ref = refs.pop(0)
    acc_ref = refs.pop(0)
    ssq_ref = refs.pop(0) if has_gamma else None

    k = pl.program_id(2)

    @pl.when(k == 0)
    def _():
        acc_ref[...] = jnp.zeros_like(acc_ref)
        if has_gamma:
            ssq_ref[...] = jnp.zeros_like(ssq_ref)

    xf = x_ref[...].astype(jnp.float32)
    if has_gamma:
        # accumulate sum(x^2) over K tiles; gamma applied per K slice.
        ssq_ref[...] += jnp.sum(xf * xf, axis=-1, keepdims=True)
        xf = xf * g_ref[...].astype(jnp.float32)
    acc_ref[...] += jnp.dot(xf.astype(_MXU_DTYPE), w_ref[...].astype(_MXU_DTYPE),
                            preferred_element_type=jnp.float32)

    @pl.when(k == pl.num_programs(2) - 1)
    def _():
        out = acc_ref[...]
        if has_gamma:
            # per-row rsqrt(mean(x^2)+eps) commutes with the matmul.
            out = out * lax.rsqrt(ssq_ref[...] / k_total + eps)
        out = out + b_ref[...].astype(jnp.float32)
        if act_out == "relu":                     # LeakyReLU(0) == ReLU
            out = jnp.maximum(out, 0.0)
        if has_res:                               # SKIPLESS combine: a + mlp
            out = out + r_ref[...].astype(jnp.float32)
        o_ref[...] = out.astype(o_ref.dtype)


def fused_matmul(x, w, b, *, gamma=None, eps=1e-5, act_out=None, residual=None,
                 tm=_TM, tn=_TN, tk=_TK):
    # x: (M, K), w: (K, N), b: (N,); optional gamma: (K,), residual: (M, N)
    M, K = x.shape
    N = w.shape[1]
    tm, tn, tk = _tile(M, tm), _tile(N, tn), _tile(K, tk)
    grid = (M // tm, N // tn, K // tk)

    has_g = gamma is not None
    has_r = residual is not None

    in_specs = [
        pl.BlockSpec((tm, tk), lambda i, j, k: (i, k)),
        pl.BlockSpec((tk, tn), lambda i, j, k: (k, j)),
        pl.BlockSpec((1, tn), lambda i, j, k: (0, j)),
    ]
    inputs = [x, w, b.reshape(1, N)]
    if has_g:
        in_specs.append(pl.BlockSpec((1, tk), lambda i, j, k: (0, k)))
        inputs.append(gamma.reshape(1, K))
    if has_r:
        in_specs.append(pl.BlockSpec((tm, tn), lambda i, j, k: (i, j)))
        inputs.append(residual)

    scratch = [pltpu.VMEM((tm, tn), jnp.float32)]
    if has_g:
        scratch.append(pltpu.VMEM((tm, 1), jnp.float32))

    kernel = functools.partial(_fused_matmul_kernel, has_gamma=has_g,
                               has_res=has_r, act_out=act_out,
                               eps=float(eps), k_total=float(K))
    return pl.pallas_call(
        kernel,
        out_shape=jax.ShapeDtypeStruct((M, N), x.dtype),
        grid=grid,
        in_specs=in_specs,
        out_specs=pl.BlockSpec((tm, tn), lambda i, j, k: (i, j)),
        scratch_shapes=scratch,
        compiler_params=pltpu.CompilerParams(
            dimension_semantics=("parallel", "parallel", "arbitrary")),
    )(*inputs)


# --------------------------------- RMSNorm -----------------------------------

def _rmsnorm_kernel(x_ref, g_ref, o_ref, *, eps):
    x = x_ref[...].astype(jnp.float32)
    ms = jnp.mean(x * x, axis=-1, keepdims=True)
    y = x * lax.rsqrt(ms + eps)
    o_ref[...] = (y * g_ref[...].astype(jnp.float32)).astype(o_ref.dtype)


def rmsnorm(x, g, eps, *, tm=512):
    # x: (M, D), g: (D,)   — row-tiled, "parallel" grid.
    M, D = x.shape
    tm = _tile(M, tm)
    return pl.pallas_call(
        functools.partial(_rmsnorm_kernel, eps=float(eps)),
        out_shape=jax.ShapeDtypeStruct((M, D), x.dtype),
        grid=(M // tm,),
        in_specs=[pl.BlockSpec((tm, D), lambda i: (i, 0)),
                  pl.BlockSpec((1, D), lambda i: (0, 0))],
        out_specs=pl.BlockSpec((tm, D), lambda i: (i, 0)),
        compiler_params=pltpu.CompilerParams(dimension_semantics=("parallel",)),
    )(x, g.reshape(1, D))


# -------------------------------- attention ----------------------------------

def _attn_kernel(qk_ref, v_ref, sg_ref, cg_ref, pv_ref, o_ref,
                 *, n_head, hd, d, tq, scale):
    # qk_ref: (T, 2D) c_attn output for one batch; v_ref: (T, D) = ln_1(x);
    # o_ref: (tq, D).  Heads are looped (unrolled) in-kernel; all index math
    # (mask / diag / uniform bias) is hoisted out of the head loop.
    qi = pl.program_id(1)
    T = v_ref.shape[0]
    q0 = pl.multiple_of(qi * tq, tq)

    rows = qi * tq + lax.broadcasted_iota(jnp.int32, (tq, T), 0)  # abs query pos
    cols = lax.broadcasted_iota(jnp.int32, (tq, T), 1)            # key pos
    causal = cols <= rows
    diag = (cols == rows).astype(jnp.float32)
    # tril(1 / (row + 1)) — reciprocal on the EUP instead of a VALU divide.
    row_inv = pl.reciprocal((rows + 1).astype(jnp.float32), approx=True)
    uniform = jnp.where(causal, row_inv, 0.0)

    inv_sqrt_hd = 1.0 / math.sqrt(hd)
    pv = pv_ref[0]

    for h in range(n_head):
        q = qk_ref[pl.ds(q0, tq), pl.ds(h * hd, hd)].astype(jnp.float32)
        if scale:
            q = q * inv_sqrt_hd            # fold 1/sqrt(hd) into q
        k = qk_ref[:, pl.ds(d + h * hd, hd)]
        vh = v_ref[:, pl.ds(h * hd, hd)]

        # q @ k^T via dot_general contracting on hd (no materialized K^T).
        s = lax.dot_general(q.astype(_MXU_DTYPE), k.astype(_MXU_DTYPE),
                            (((1,), (1,)), ((), ())),
                            preferred_element_type=jnp.float32)   # (tq, T)
        s = jnp.where(causal, s, -1e10)

        m = jnp.max(s, axis=-1, keepdims=True)
        e = jnp.exp(s - m)
        p = e * pl.reciprocal(jnp.sum(e, axis=-1, keepdims=True), approx=True)

        bias = sg_ref[h] * diag - cg_ref[h] * uniform              # post-softmax
        o = jnp.dot((p + bias).astype(_MXU_DTYPE), vh.astype(_MXU_DTYPE),
                    preferred_element_type=jnp.float32)            # (tq, hd)
        # partial VMEM writes; the full (tq, D) block is DMA'd out lane-dense.
        o_ref[:, h * hd:(h + 1) * hd] = (o * pv).astype(o_ref.dtype)


def attention(qk, v, skip_gain, centre_gain, proj_value, *, n_head, scale=True,
              tq=128):
    # qk: (B, T, 2D) (query||key), v: (B, T, D); gains: (H,), proj_value: (1,)
    B, T, D2 = qk.shape
    D = v.shape[-1]
    hd = D // n_head
    tq = _tile(T, tq)
    grid = (B, T // tq)
    kernel = functools.partial(_attn_kernel, n_head=n_head, hd=hd, d=D,
                               tq=tq, scale=scale)
    return pl.pallas_call(
        kernel,
        out_shape=jax.ShapeDtypeStruct((B, T, D), v.dtype),
        grid=grid,
        in_specs=[
            pl.BlockSpec((None, T, D2), lambda b, qi: (b, 0, 0)),
            pl.BlockSpec((None, T, D), lambda b, qi: (b, 0, 0)),
            pl.BlockSpec(memory_space=pltpu.MemorySpace.SMEM),
            pl.BlockSpec(memory_space=pltpu.MemorySpace.SMEM),
            pl.BlockSpec(memory_space=pltpu.MemorySpace.SMEM),
        ],
        out_specs=pl.BlockSpec((None, tq, D), lambda b, qi: (b, qi, 0)),
        compiler_params=pltpu.CompilerParams(
            dimension_semantics=("parallel", "parallel")),
    )(qk, v, skip_gain, centre_gain, proj_value)


# ------------------------------ model (glue) --------------------------------

def block_forward(p, x, cfg):
    B, T, D = x.shape
    H = cfg["n_head"]
    hd = D // H
    eps = cfg["eps"]
    x2 = x.reshape(-1, D)

    # ln_1 is materialized (tiled kernel) because it is also the identity-V
    # source and the `present` value.
    xn = rmsnorm(x2, p["ln_1_g"], eps)                            # (M, D)

    # c_attn: tiled bf16 matmul on the normalized hidden.
    qk = fused_matmul(xn, p["c_attn_w"], p["c_attn_b"])           # (M, 2D)
    qk3 = qk.reshape(B, T, 2 * D)
    xn3 = xn.reshape(B, T, D)

    # TODO(synk): reference code sets value = split_heads(c_attn(x)) (head dim
    # 2*hd), which makes the rest of the block shape-inconsistent / unrunnable;
    # we use the skipless-transformer intent of an identity V-projection:
    # value = split_heads(ln_1(x)), scaled afterwards by proj_value (fused into
    # the attention kernel epilogue).
    a = attention(qk3, xn3, p["attn_skip_gain"], p["attn_centre_gain"],
                  p["proj_value"], n_head=H, scale=True)          # (B, T, D)

    # present (model output) in the reference (2, B, H, T, hd) layout.
    key = qk3[..., D:].reshape(B, T, H, hd).transpose(0, 2, 1, 3)
    val = xn3.reshape(B, T, H, hd).transpose(0, 2, 1, 3)
    present = jnp.stack([key, val])

    a2 = a.reshape(-1, D)
    mlp_in = x2 if cfg["parallel"] else a2
    # ln_2 fused into c_fc (norm prologue + ReLU epilogue, no HBM round-trip
    # for the normalized activations).
    h = fused_matmul(mlp_in, p["c_fc_w"], p["c_fc_b"],
                     gamma=p["ln_2_g"], eps=eps, act_out="relu")  # (M, 4D)
    # c_proj with the attention branch fused as the epilogue add:
    # SKIPLESS: x = a + mlp(...), no residual of the block input.
    out = fused_matmul(h, p["c_proj_w"], p["c_proj_b"], residual=a2)
    return out.reshape(B, T, D), present


def model_forward(params, input_ids, cfg):
    B, T = input_ids.shape
    position_ids = jnp.broadcast_to(jnp.arange(T, dtype=jnp.int32)[None, :], (B, T))

    inputs_embeds = jnp.take(params["wte"], input_ids, axis=0)       # (B, T, D)
    position_embeds = jnp.take(params["wpe"], position_ids, axis=0)  # (B, T, D)
    hidden = inputs_embeds + position_embeds

    presents = []
    for lp in params["blocks"]:
        hidden, present = block_forward(lp, hidden, cfg)
        presents.append(present)

    D = hidden.shape[-1]
    hidden = rmsnorm(hidden.reshape(-1, D), params["ln_f_g"], cfg["eps"]).reshape(B, T, D)
    return hidden, presents


# --------------------------- deterministic init ------------------------------

def init_params(key, cfg):
    D = cfg["n_embd"]
    H = cfg["n_head"]
    V = cfg["vocab_size"]
    P = cfg["n_positions"]

    keys = jax.random.split(key, 2 + 3 * cfg["n_layer"])
    params = {
        "wte": jax.random.normal(keys[0], (V, D), jnp.float32),   # nn.Embedding default N(0,1)
        "wpe": jax.random.normal(keys[1], (P, D), jnp.float32),
        "ln_f_g": jnp.ones((D,), jnp.float32),
        "blocks": [],
    }
    # TODO(synk): reference Attention.__init__ also creates attn_mat_resid_gain
    # (referencing a nonexistent self.num_heads); it is unused in forward, so omitted.
    for l in range(cfg["n_layer"]):
        k0, k1, k2 = keys[2 + 3 * l: 5 + 3 * l]
        blk = {
            "ln_1_g": jnp.ones((D,), jnp.float32),
            "ln_2_g": jnp.ones((D,), jnp.float32),
            "c_attn_w": 0.02 * jax.random.normal(k0, (D, 2 * D), jnp.float32),
            "c_attn_b": jnp.zeros((2 * D,), jnp.float32),
            "attn_skip_gain": jnp.ones((H,), jnp.float32),
            "attn_centre_gain": jnp.ones((H,), jnp.float32),
            "proj_value": jnp.ones((1,), jnp.float32),
            "c_fc_w": 0.02 * jax.random.normal(k1, (D, 4 * D), jnp.float32),
            "c_fc_b": jnp.zeros((4 * D,), jnp.float32),
            "c_proj_w": 0.02 * jax.random.normal(k2, (4 * D, D), jnp.float32),
            "c_proj_b": jnp.zeros((D,), jnp.float32),
        }
        params["blocks"].append(blk)
    return params


# ---------------------------------- main -------------------------------------

if __name__ == "__main__":
    cfg = dict(
        vocab_size=64,
        n_positions=16,
        n_ctx=8,
        n_embd=32,
        n_head=4,
        n_layer=2,
        eps=1e-5,
        parallel=True,
    )

    key = jax.random.PRNGKey(0)
    pkey, dkey = jax.random.split(key)
    params = init_params(pkey, cfg)

    B, T = 2, 8
    input_ids = jax.random.randint(dkey, (B, T), 0, cfg["vocab_size"], dtype=jnp.int32)

    hidden, presents = model_forward(params, input_ids, cfg)
    hidden = jax.block_until_ready(hidden)
    presents = [jax.block_until_ready(p) for p in presents]

    assert hidden.shape == (B, T, cfg["n_embd"])
    assert all(p.shape == (2, B, cfg["n_head"], T, cfg["n_embd"] // cfg["n_head"])
               for p in presents)
    print("KERNEL_OK")
</pallas_src>

<mosaic_0001>
module attributes {stable_mosaic.version = 11 : i64} {
  func.func @_rmsnorm_kernel(%arg0: i32, %arg1: memref<16x32xf32, #tpu.memory_space<vmem>>, %arg2: memref<1x32xf32, #tpu.memory_space<vmem>>, %arg3: memref<16x32xf32, #tpu.memory_space<vmem>>) attributes {dimension_semantics = [#tpu.dimension_semantics<parallel>], iteration_bounds = array<i64: 1>, scalar_prefetch = 0 : i64, scratch_operands = 0 : i64, tpu.core_type = #tpu.core_type<tc>, window_params = [{transform_indices = @transform_0, window_bounds = array<i64: 16, 32>}, {pipeline_mode = #tpu.pipeline_mode<synchronous>, transform_indices = @transform_1, window_bounds = array<i64: 1, 32>}, {transform_indices = @transform_2, window_bounds = array<i64: 16, 32>}]} {
    %c0 = arith.constant 0 : index
    %c0_0 = arith.constant 0 : index
    %0 = vector.load %arg1[%c0, %c0_0] : memref<16x32xf32, #tpu.memory_space<vmem>>, vector<16x32xf32>
    %1 = arith.mulf %0, %0 : vector<16x32xf32>
    %cst = arith.constant dense<0.000000e+00> : vector<16xf32>
    %2 = vector.multi_reduction <add>, %1, %cst [1] : vector<16x32xf32> to vector<16xf32>
    %3 = vector.shape_cast %2 : vector<16xf32> to vector<16x1xf32>
    %cst_1 = arith.constant 3.200000e+01 : f32
    %4 = vector.broadcast %cst_1 : f32 to vector<16x1xf32>
    %5 = arith.divf %3, %4 : vector<16x1xf32>
    %cst_2 = arith.constant 9.99999974E-6 : f32
    %6 = vector.broadcast %cst_2 : f32 to vector<16x1xf32>
    %7 = arith.addf %5, %6 : vector<16x1xf32>
    %8 = math.rsqrt %7 : vector<16x1xf32>
    %9 = vector.broadcast %8 : vector<16x1xf32> to vector<16x32xf32>
    %10 = arith.mulf %0, %9 : vector<16x32xf32>
    %c0_3 = arith.constant 0 : index
    %c0_4 = arith.constant 0 : index
    %11 = vector.load %arg2[%c0_3, %c0_4] : memref<1x32xf32, #tpu.memory_space<vmem>>, vector<1x32xf32>
    %12 = vector.broadcast %11 : vector<1x32xf32> to vector<16x32xf32>
    %13 = arith.mulf %10, %12 : vector<16x32xf32>
    %c0_5 = arith.constant 0 : index
    %c0_6 = arith.constant 0 : index
    %14 = vector.load %arg3[%c0_5, %c0_6] : memref<16x32xf32, #tpu.memory_space<vmem>>, vector<16x32xf32>
    tpu.vector_store %arg3[%c0_5, %c0_6], %13 {strides = array<i32>} : memref<16x32xf32, #tpu.memory_space<vmem>>, vector<16x32xf32>,
    return
  }
  func.func @transform_0(%arg0: i32) -> (i32, i32) {
    %c0_i32 = arith.constant 0 : i32
    %c0_i32_0 = arith.constant 0 : i32
    return %arg0, %c0_i32 : i32, i32
  }
  func.func @transform_1(%arg0: i32) -> (i32, i32) {
    %c0_i32 = arith.constant 0 : i32
    %c0_i32_0 = arith.constant 0 : i32
    %c0_i32_1 = arith.constant 0 : i32
    return %c0_i32, %c0_i32_0 : i32, i32
  }
  func.func @transform_2(%arg0: i32) -> (i32, i32) {
    %c0_i32 = arith.constant 0 : i32
    %c0_i32_0 = arith.constant 0 : i32
    return %arg0, %c0_i32 : i32, i32
  }
}

</mosaic_0001>

<llo_original>
// kernel: tpu_custom_call.1
$region0: #{tpu_custom_call.1}
  #allocation0 [shape = 'u32[]', space=smem, size = 0x4, offset = 0x4, fixed_abs, tag = 'smem constant byte address 0x4 - core index']
  #allocation1 [shape = 'u32[144,128]{1,0:T(1,128)}', space=vmem, size = 0x12000, scoped, tag = 'internal scratch']
  %s0 = inlined_call_operand.hbm [shape: f32[16,32], index: 0, kind: input, shape index: {}]
  %s1 = inlined_call_operand.vmem [shape: f32[1,32], index: 1, kind: input, shape index: {}]
  %s2 = inlined_call_operand.hbm [shape: f32[16,32], index: 2, kind: output, shape index: {}]
  %s3 = sld [smem:[#allocation0]]
  $region22: #{tpu_custom_call.1} parent=0
    _
  %s5 = ssub.s32 1, %s3
  %s6 = scalar_select 0, %s5, %s3
  $region1: #{tpu_custom_call.1} parent=0
    #allocation2 [shape = 'u8[8192]{0}', space=vmem, size = 0x2000, scoped, tag = 'input window, operand 0, single buffered']
    #allocation3 [shape = 's32[1]{0}', space=sflag, size = 0x4, scoped, tag = 'scoped memory for tpu_custom_call.1']
    #allocation4 [shape = 's32[1]{0}', space=sflag, size = 0x4, scoped, tag = 'scoped memory for tpu_custom_call.1']
    #allocation5 [shape = 'u8[8192]{0}', space=vmem, size = 0x2000, scoped, tag = 'output window, operand 0, single buffered']
    %7 = vsyncpa [#allocation3], 0
    %8 = vsyncpa [#allocation4], 0
    // Predicated region
    $region2: #{tpu_custom_call.1} parent=1 // pred_check
      _
    $region3: #{tpu_custom_call.1} parent=1 // pred_check_branch
      %10 = sbr.rel (0) target = $region5
    $region4: #{tpu_custom_call.1} parent=1 // pred_region
      %s12 = ssub.s32 256, 256
      %13 = vsyncadd [#allocation3], %s12
      %s14 = sshll.u32 [#allocation2], 4
      %s15 = int_to_ptr.vmem [resolvable:$true] %s14
      %20 = dma.hbm_to_vmem [thread:$0]  %s0, 256, %s15, [#allocation3], 128, 128, 8
    $region5: #{tpu_custom_call.1} parent=1 // pred_fallthru
      _
    // Predicated region
    $region6: #{tpu_custom_call.1} parent=1 // pred_check
      _
    $region7: #{tpu_custom_call.1} parent=1 // pred_check_branch
      %22 = sbr.rel (0) target = $region9
    $region8: #{tpu_custom_call.1} parent=1 // pred_region
      _
    $region9: #{tpu_custom_call.1} parent=1 // pred_fallthru
      _
    // Predicated region
    $region10: #{tpu_custom_call.1} parent=1 // pred_check
      _
    $region11: #{tpu_custom_call.1} parent=1 // pred_check_branch
      %24 = sbr.rel (0) target = $region13
    $region12: #{tpu_custom_call.1} parent=1 // pred_region
      %25 = dma.done [#allocation3], 256
    $region13: #{tpu_custom_call.1} parent=1 // pred_fallthru
      _
    %v26 = vld [vmem:[#allocation2] sm:$0xff]
    %v27 = vld [vmem:[#allocation2 + $0x8] sm:$0xff]
    %v28 = vmul.f32 %v26, %v26
    %v29 = vmul.f32 %v27, %v27
    %vm30 = vcmask 261120
    %v31 = vsel %vm30, %v28, 0.0
    %32 = vadd.xlane.f32.xlu0 %v31
    %v33 = vpop.xlane.xlu0 %32
    %v34 = vsel %vm30, %v29, 0.0
    %35 = vadd.xlane.f32.xlu0 %v34
    %v36 = vpop.xlane.xlu0 %35
    %v37 = vrcp.pop 32.0
    %v38 = vmul.f32 %v33, %v37
    %v39 = vmul.f32 %v36, %v37
    %v40 = vadd.f32 %v38, 1e-05
    %v41 = vadd.f32 %v39, 1e-05
    %v42 = vrsqrt.pop %v40
    %v43 = vrsqrt.pop %v41
    %v44 = vmul.f32 %v26, %v42
    %v45 = vmul.f32 %v27, %v43
    %v46 = vld [vmem:[%s1] sm:$0x1]
    %v48 = vlaneseq
    %v49 = vshrl.u32 %v48, 7
    %v50 = vsub.s32 0, %v49
    %v51 = vrot.slane %v46, %v50
    %v53 = vmul.f32 %v44, %v51
    %v54 = vmul.f32 %v45, %v51
    %55 = vst.msk [vmem:[#allocation5] sm:$0xff] %vm30, %v53
    %56 = vst.msk [vmem:[#allocation5 + $0x8] sm:$0xff] %vm30, %v54
    // Predicated region
    $region14: #{tpu_custom_call.1} parent=1 // pred_check
      _
    $region15: #{tpu_custom_call.1} parent=1 // pred_check_branch
      %58 = sbr.rel (0) target = $region17
    $region16: #{tpu_custom_call.1} parent=1 // pred_region
      %s60 = ssub.s32 256, 256
      %61 = vsyncadd [#allocation4], %s60
      %s62 = sshll.u32 [#allocation5], 4
      %s63 = int_to_ptr.vmem [resolvable:$true] %s62
      %68 = dma.vmem_to_hbm [thread:$0]  %s63, 256, %s2, [#allocation4], 128, 128, 8
    $region17: #{tpu_custom_call.1} parent=1 // pred_fallthru
      _
    // Predicated region
    $region18: #{tpu_custom_call.1} parent=1 // pred_check
      _
    $region19: #{tpu_custom_call.1} parent=1 // pred_check_branch
      %70 = sbr.rel (0) target = $region21
    $region20: #{tpu_custom_call.1} parent=1 // pred_region
      %71 = dma.done [#allocation4], 256
    $region21: #{tpu_custom_call.1} parent=1 // pred_fallthru
      _
    %72 = vsyncpa [#allocation3], 1
    %73 = vsyncpa [#allocation4], 1

</llo_original>
